<compile_context>
chip_gen: v6e
topology: v6e:2x2x1
jax: 0.10.0
libtpu: 0.0.40
codegen_flags: <defaults>
</compile_context>

<pallas_src>
import functools

import jax
import jax.numpy as jnp
from jax.experimental import pallas as pl
from jax.experimental.pallas import tpu as pltpu

_LANE = 128   # lane width
_SUB = 16     # sublane granularity safe for both f32 (8) and bf16 (16)


def _round_up(x, m):
    return ((x + m - 1) // m) * m


# --------------------------------------------------------------------------
# Fused MLP kernel: one grid step processes a (TM, K) tile of the batch and
# runs all Linear+ReLU layers back-to-back on the MXU, keeping every
# intermediate activation in registers / VMEM (never touching HBM).
# --------------------------------------------------------------------------
def _fused_mlp_kernel(*refs, n_layers):
    # refs = (x_ref, w1, b1, w2, b2, ..., wL, bL, o_ref)
    x_ref = refs[0]
    o_ref = refs[-1]
    h = x_ref[...]                                  # bf16 activations
    for layer in range(n_layers):
        w_ref = refs[1 + 2 * layer]
        b_ref = refs[2 + 2 * layer]
        # bf16 x bf16 on the MXU, f32 accumulation; bias add + ReLU in f32.
        acc = jnp.dot(h.astype(w_ref.dtype), w_ref[...],
                      preferred_element_type=jnp.float32)
        acc = acc + b_ref[...].astype(jnp.float32)
        h = jnp.maximum(acc, 0.0)                   # ReLU after every layer, incl. last
    o_ref[...] = h.astype(o_ref.dtype)


def baseline_regressor_forward(expression, packed_params, *, tm_max=1024):
    """Single fused pallas_call: x -> ReLU(Linear(...)) chained n_layers times.

    expression:    (M, K) float32 (cast to the packed weight dtype inside)
    packed_params: list of (w_pad, b_pad) with w_pad (K_in_pad, N_pad) already
                   transposed + lane-padded, b_pad (1, N_pad). Produced once
                   by `prepare_params` (glue, not hot path).
    tm_max:        batch-tile rows. (tm, 128) f32 intermediates are <=0.5 MiB,
                   far below every generation's VMEM limit.
    """
    M, K = expression.shape
    n_layers = len(packed_params)
    n_out = packed_params[-1][0].shape[1]
    compute_dtype = packed_params[0][0].dtype

    # --- batch tiling: pad M up to a multiple of the tile; NEVER fall back to
    #     one giant block (keeps VMEM bounded, keeps pipelining + megacore). ---
    m_pad = _round_up(M, _SUB)
    if m_pad <= tm_max:
        tm = m_pad                                              # tiny batch: 1 tile
    else:
        # >= 2 grid steps so both v7x TensorCores get work; cap at tm_max.
        tm = min(tm_max, _round_up(pl.cdiv(m_pad, 2), _SUB))
    m_pad = _round_up(m_pad, tm)
    grid_m = m_pad // tm

    x = expression.astype(compute_dtype)
    if m_pad != M:
        x = jnp.pad(x, ((0, m_pad - M), (0, 0)))                # padded rows are dropped below

    # Input: batch-tiled + double-buffered.  Weights/biases: whole-array VMEM
    # residents, NOT pipelined (no 2x buffering, no per-tile DMA descriptors).
    in_specs = [pl.BlockSpec((tm, K), lambda i: (i, 0))]
    flat_params = []
    for (w, b) in packed_params:
        in_specs.append(pl.BlockSpec(memory_space=pltpu.MemorySpace.VMEM))
        in_specs.append(pl.BlockSpec(memory_space=pltpu.MemorySpace.VMEM))
        flat_params.extend([w, b])

    flops = 2 * m_pad * sum(int(w.shape[0]) * int(w.shape[1])
                            for (w, _) in packed_params)
    bytes_accessed = (
        m_pad * K * x.dtype.itemsize
        + sum(int(w.size) * w.dtype.itemsize + int(b.size) * b.dtype.itemsize
              for (w, b) in packed_params)
        + m_pad * n_out * 4)

    kernel = functools.partial(_fused_mlp_kernel, n_layers=n_layers)
    out = pl.pallas_call(
        kernel,
        out_shape=jax.ShapeDtypeStruct((m_pad, n_out), jnp.float32),
        grid_spec=pl.GridSpec(
            grid=(grid_m,),
            in_specs=in_specs,
            out_specs=pl.BlockSpec((tm, n_out), lambda i: (i, 0)),
        ),
        compiler_params=pltpu.CompilerParams(
            # M axis is "parallel": megacore-sharded on v7x (2 TCs/chip).
            dimension_semantics=("parallel",)),
        cost_estimate=pl.CostEstimate(flops=flops, transcendentals=0,
                                      bytes_accessed=bytes_accessed),
    )(x, *flat_params)
    return out[:M] if m_pad != M else out


# --------------------------------------------------------------------------
# Parameter setup (done once, outside the hot path)
# --------------------------------------------------------------------------
def init_params(layer_list, key):
    """Deterministic init mimicking nn.Linear (uniform +-1/sqrt(fan_in)).

    Stored PyTorch-style: weight (out, in), bias (out,)."""
    params = []
    for i in range(len(layer_list) - 1):
        fan_in, fan_out = layer_list[i], layer_list[i + 1]
        key, kw, kb = jax.random.split(key, 3)
        bound = 1.0 / jnp.sqrt(jnp.float32(fan_in))
        w = jax.random.uniform(kw, (fan_out, fan_in), jnp.float32,
                               minval=-bound, maxval=bound)
        b = jax.random.uniform(kb, (fan_out,), jnp.float32,
                               minval=-bound, maxval=bound)
        params.append((w, b))
    return params


def prepare_params(torch_params, layer_list, *, lane=_LANE, dtype=jnp.bfloat16):
    """One-time glue: transpose (out,in)->(in,out), reshape bias to (1,N),
    zero-pad hidden feature dims to multiples of 128 lanes, and cast to bf16
    for MXU throughput + halved input HBM traffic (accumulation stays f32 in
    the kernel).  The model input dim and final output dim are left unpadded."""
    n = len(torch_params)
    packed = []
    in_dim = layer_list[0]                      # current (possibly padded) K
    for layer, (w, b) in enumerate(torch_params):
        out_dim = w.shape[0]
        last = (layer == n - 1)
        out_pad = out_dim if last else _round_up(out_dim, lane)
        w_t = jnp.transpose(w)                  # (in, out)
        w_pad = jnp.zeros((in_dim, out_pad), jnp.float32)
        w_pad = w_pad.at[: w_t.shape[0], :out_dim].set(w_t)
        b_pad = jnp.zeros((1, out_pad), jnp.float32)
        b_pad = b_pad.at[0, :out_dim].set(b)
        packed.append((w_pad.astype(dtype), b_pad.astype(dtype)))
        in_dim = out_pad
    return packed


if __name__ == "__main__":
    # layer_list: input genes -> hidden -> hidden -> 2 (X, Y coordinates)
    layer_list = [32, 64, 32, 2]
    batch = 8

    key = jax.random.PRNGKey(0)
    key, kx = jax.random.split(key)
    expression = jax.random.normal(kx, (batch, layer_list[0]), jnp.float32)

    torch_params = init_params(layer_list, key)            # PyTorch-style (out,in)
    packed_params = prepare_params(torch_params, layer_list)  # bf16, lane-padded

    out = baseline_regressor_forward(expression, packed_params)
    out = jax.block_until_ready(out)
    assert out.shape == (batch, layer_list[-1])
    assert out.dtype == jnp.float32

    # Reference mimicking the kernel numerics exactly: bf16 inputs/weights,
    # f32 accumulation / bias add / ReLU, activations recast to bf16 between
    # layers (but not after the last one).  Matches the original module up to
    # the bf16 quantization of weights/activations.
    cd = packed_params[0][0].dtype
    ref = expression.astype(cd).astype(jnp.float32)
    for li, (w, b) in enumerate(torch_params):
        wt = w.astype(cd).astype(jnp.float32)
        bt = b.astype(cd).astype(jnp.float32)
        ref = jnp.maximum(ref @ wt.T + bt, 0.0)
        if li < len(torch_params) - 1:
            ref = ref.astype(cd).astype(jnp.float32)
    assert jnp.allclose(out, ref, atol=1e-4, rtol=1e-4), (
        float(jnp.max(jnp.abs(out - ref))))

    print("KERNEL_OK")
</pallas_src>

<mosaic_0001>
module attributes {stable_mosaic.version = 11 : i64} {
  func.func @_fused_mlp_kernel(%arg0: i32, %arg1: memref<16x32xbf16, #tpu.memory_space<vmem>>, %arg2: memref<32x128xbf16, #tpu.memory_space<vmem>>, %arg3: memref<1x128xbf16, #tpu.memory_space<vmem>>, %arg4: memref<128x128xbf16, #tpu.memory_space<vmem>>, %arg5: memref<1x128xbf16, #tpu.memory_space<vmem>>, %arg6: memref<128x2xbf16, #tpu.memory_space<vmem>>, %arg7: memref<1x2xbf16, #tpu.memory_space<vmem>>, %arg8: memref<16x2xf32, #tpu.memory_space<vmem>>) attributes {dimension_semantics = [#tpu.dimension_semantics<parallel>], iteration_bounds = array<i64: 1>, scalar_prefetch = 0 : i64, scratch_operands = 0 : i64, tpu.core_type = #tpu.core_type<tc>, window_params = [{transform_indices = @transform_0, window_bounds = array<i64: 16, 32>}, {pipeline_mode = #tpu.pipeline_mode<synchronous>, transform_indices = @transform_1, window_bounds = array<i64: 32, 128>}, {pipeline_mode = #tpu.pipeline_mode<synchronous>, transform_indices = @transform_2, window_bounds = array<i64: 1, 128>}, {pipeline_mode = #tpu.pipeline_mode<synchronous>, transform_indices = @transform_3, window_bounds = array<i64: 128, 128>}, {pipeline_mode = #tpu.pipeline_mode<synchronous>, transform_indices = @transform_4, window_bounds = array<i64: 1, 128>}, {pipeline_mode = #tpu.pipeline_mode<synchronous>, transform_indices = @transform_5, window_bounds = array<i64: 128, 2>}, {pipeline_mode = #tpu.pipeline_mode<synchronous>, transform_indices = @transform_6, window_bounds = array<i64: 1, 2>}, {transform_indices = @transform_7, window_bounds = array<i64: 16, 2>}]} {
    %c0 = arith.constant 0 : index
    %c0_0 = arith.constant 0 : index
    %0 = vector.load %arg1[%c0, %c0_0] : memref<16x32xbf16, #tpu.memory_space<vmem>>, vector<16x32xbf16>
    %c0_1 = arith.constant 0 : index
    %c0_2 = arith.constant 0 : index
    %1 = vector.load %arg2[%c0_1, %c0_2] : memref<32x128xbf16, #tpu.memory_space<vmem>>, vector<32x128xbf16>
    %cst = arith.constant dense<0.000000e+00> : vector<16x128xf32>
    %2 = tpu.matmul %0, %1, %cst {dimension_numbers = #tpu.dot_dimension_numbers<[1], [0], [0], [1], [0, 0, 1, 1], [], []>} : vector<16x32xbf16>, vector<32x128xbf16>, vector<16x128xf32> -> vector<16x128xf32>
    %c0_3 = arith.constant 0 : index
    %c0_4 = arith.constant 0 : index
    %3 = vector.load %arg3[%c0_3, %c0_4] : memref<1x128xbf16, #tpu.memory_space<vmem>>, vector<1x128xbf16>
    %4 = arith.extf %3 : vector<1x128xbf16> to vector<1x128xf32>
    %5 = vector.broadcast %4 : vector<1x128xf32> to vector<16x128xf32>
    %6 = arith.addf %2, %5 : vector<16x128xf32>
    %cst_5 = arith.constant 0.000000e+00 : f32
    %7 = vector.broadcast %cst_5 : f32 to vector<16x128xf32>
    %8 = arith.maximumf %6, %7 : vector<16x128xf32>
    %9 = arith.truncf %8 : vector<16x128xf32> to vector<16x128xbf16>
    %c0_6 = arith.constant 0 : index
    %c0_7 = arith.constant 0 : index
    %10 = vector.load %arg4[%c0_6, %c0_7] : memref<128x128xbf16, #tpu.memory_space<vmem>>, vector<128x128xbf16>
    %cst_8 = arith.constant dense<0.000000e+00> : vector<16x128xf32>
    %11 = tpu.matmul %9, %10, %cst_8 {dimension_numbers = #tpu.dot_dimension_numbers<[1], [0], [0], [1], [0, 0, 1, 1], [], []>} : vector<16x128xbf16>, vector<128x128xbf16>, vector<16x128xf32> -> vector<16x128xf32>
    %c0_9 = arith.constant 0 : index
    %c0_10 = arith.constant 0 : index
    %12 = vector.load %arg5[%c0_9, %c0_10] : memref<1x128xbf16, #tpu.memory_space<vmem>>, vector<1x128xbf16>
    %13 = arith.extf %12 : vector<1x128xbf16> to vector<1x128xf32>
    %14 = vector.broadcast %13 : vector<1x128xf32> to vector<16x128xf32>
    %15 = arith.addf %11, %14 : vector<16x128xf32>
    %cst_11 = arith.constant 0.000000e+00 : f32
    %16 = vector.broadcast %cst_11 : f32 to vector<16x128xf32>
    %17 = arith.maximumf %15, %16 : vector<16x128xf32>
    %18 = arith.truncf %17 : vector<16x128xf32> to vector<16x128xbf16>
    %c0_12 = arith.constant 0 : index
    %c0_13 = arith.constant 0 : index
    %19 = vector.load %arg6[%c0_12, %c0_13] : memref<128x2xbf16, #tpu.memory_space<vmem>>, vector<128x2xbf16>
    %cst_14 = arith.constant dense<0.000000e+00> : vector<16x2xf32>
    %20 = tpu.matmul %18, %19, %cst_14 {dimension_numbers = #tpu.dot_dimension_numbers<[1], [0], [0], [1], [0, 0, 1, 1], [], []>} : vector<16x128xbf16>, vector<128x2xbf16>, vector<16x2xf32> -> vector<16x2xf32>
    %c0_15 = arith.constant 0 : index
    %c0_16 = arith.constant 0 : index
    %21 = vector.load %arg7[%c0_15, %c0_16] : memref<1x2xbf16, #tpu.memory_space<vmem>>, vector<1x2xbf16>
    %22 = arith.extf %21 : vector<1x2xbf16> to vector<1x2xf32>
    %23 = vector.broadcast %22 : vector<1x2xf32> to vector<16x2xf32>
    %24 = arith.addf %20, %23 : vector<16x2xf32>
    %cst_17 = arith.constant 0.000000e+00 : f32
    %25 = vector.broadcast %cst_17 : f32 to vector<16x2xf32>
    %26 = arith.maximumf %24, %25 : vector<16x2xf32>
    %c0_18 = arith.constant 0 : index
    %c0_19 = arith.constant 0 : index
    %27 = vector.load %arg8[%c0_18, %c0_19] : memref<16x2xf32, #tpu.memory_space<vmem>>, vector<16x2xf32>
    tpu.vector_store %arg8[%c0_18, %c0_19], %26 {strides = array<i32>} : memref<16x2xf32, #tpu.memory_space<vmem>>, vector<16x2xf32>,
    return
  }
  func.func @transform_0(%arg0: i32) -> (i32, i32) {
    %c0_i32 = arith.constant 0 : i32
    %c0_i32_0 = arith.constant 0 : i32
    return %arg0, %c0_i32 : i32, i32
  }
  func.func @transform_1(%arg0: i32) -> (i32, i32) {
    %c0_i32 = arith.constant 0 : i32
    %c0_i32_0 = arith.constant 0 : i32
    %c0_i32_1 = arith.constant 0 : i32
    return %c0_i32, %c0_i32_0 : i32, i32
  }
  func.func @transform_2(%arg0: i32) -> (i32, i32) {
    %c0_i32 = arith.constant 0 : i32
    %c0_i32_0 = arith.constant 0 : i32
    %c0_i32_1 = arith.constant 0 : i32
    return %c0_i32, %c0_i32_0 : i32, i32
  }
  func.func @transform_3(%arg0: i32) -> (i32, i32) {
    %c0_i32 = arith.constant 0 : i32
    %c0_i32_0 = arith.constant 0 : i32
    %c0_i32_1 = arith.constant 0 : i32
    return %c0_i32, %c0_i32_0 : i32, i32
  }
  func.func @transform_4(%arg0: i32) -> (i32, i32) {
    %c0_i32 = arith.constant 0 : i32
    %c0_i32_0 = arith.constant 0 : i32
    %c0_i32_1 = arith.constant 0 : i32
    return %c0_i32, %c0_i32_0 : i32, i32
  }
  func.func @transform_5(%arg0: i32) -> (i32, i32) {
    %c0_i32 = arith.constant 0 : i32
    %c0_i32_0 = arith.constant 0 : i32
    %c0_i32_1 = arith.constant 0 : i32
    return %c0_i32, %c0_i32_0 : i32, i32
  }
  func.func @transform_6(%arg0: i32) -> (i32, i32) {
    %c0_i32 = arith.constant 0 : i32
    %c0_i32_0 = arith.constant 0 : i32
    %c0_i32_1 = arith.constant 0 : i32
    return %c0_i32, %c0_i32_0 : i32, i32
  }
  func.func @transform_7(%arg0: i32) -> (i32, i32) {
    %c0_i32 = arith.constant 0 : i32
    %c0_i32_0 = arith.constant 0 : i32
    return %arg0, %c0_i32 : i32, i32
  }
}

</mosaic_0001>

<llo_original>
// kernel: tpu_custom_call.1
$region0: #{tpu_custom_call.1}
  #allocation0 [shape = 'u32[]', space=smem, size = 0x4, offset = 0x4, fixed_abs, tag = 'smem constant byte address 0x4 - core index']
  #allocation1 [shape = 'u32[144,128]{1,0:T(1,128)}', space=vmem, size = 0x12000, scoped, tag = 'internal scratch']
  %s0 = inlined_call_operand.hbm [shape: bf16[16,32], index: 0, kind: input, shape index: {}]
  %s1 = inlined_call_operand.hbm [shape: bf16[32,128], index: 1, kind: input, shape index: {}]
  %s2 = inlined_call_operand.vmem [shape: bf16[1,128], index: 2, kind: input, shape index: {}]
  %s3 = inlined_call_operand.vmem [shape: bf16[128,128], index: 3, kind: input, shape index: {}]
  %s4 = inlined_call_operand.vmem [shape: bf16[1,128], index: 4, kind: input, shape index: {}]
  %s5 = inlined_call_operand.vmem [shape: bf16[128,2], index: 5, kind: input, shape index: {}]
  %s6 = inlined_call_operand.vmem [shape: bf16[1,2], index: 6, kind: input, shape index: {}]
  %s7 = inlined_call_operand.vmem [shape: f32[16,2], index: 7, kind: output, shape index: {}]
  %s8 = sld [smem:[#allocation0]]
  $region46: #{tpu_custom_call.1} parent=0
    _
  %s10 = ssub.s32 1, %s8
  %s11 = scalar_select 0, %s10, %s8
  $region1: #{tpu_custom_call.1} parent=0
    #allocation2 [shape = 'u8[4096]{0}', space=vmem, size = 0x1000, scoped, tag = 'input window, operand 0, single buffered']
    #allocation3 [shape = 's32[1]{0}', space=sflag, size = 0x4, scoped, tag = 'scoped memory for tpu_custom_call.1']
    #allocation4 [shape = 'u8[8192]{0}', space=vmem, size = 0x2000, scoped, tag = 'input window, operand 1, single buffered']
    #allocation5 [shape = 's32[1]{0}', space=sflag, size = 0x4, scoped, tag = 'scoped memory for tpu_custom_call.1']
    %12 = vsyncpa [#allocation3], 0
    %13 = vsyncpa [#allocation5], 0
    // Predicated region
    $region2: #{tpu_custom_call.1} parent=1 // pred_check
      _
    $region3: #{tpu_custom_call.1} parent=1 // pred_check_branch
      %15 = sbr.rel (0) target = $region5
    $region4: #{tpu_custom_call.1} parent=1 // pred_region
      %s17 = ssub.s32 128, 128
      %18 = vsyncadd [#allocation3], %s17
      %s19 = sshll.u32 [#allocation2], 4
      %s20 = int_to_ptr.vmem [resolvable:$true] %s19
      %25 = dma.hbm_to_vmem [thread:$0]  %s0, 128, %s20, [#allocation3], 64, 64, 4
    $region5: #{tpu_custom_call.1} parent=1 // pred_fallthru
      _
    // Predicated region
    $region6: #{tpu_custom_call.1} parent=1 // pred_check
      _
    $region7: #{tpu_custom_call.1} parent=1 // pred_check_branch
      %27 = sbr.rel (0) target = $region9
    $region8: #{tpu_custom_call.1} parent=1 // pred_region
      %s29 = ssub.s32 256, 256
      %30 = vsyncadd [#allocation5], %s29
      %s31 = sshll.u32 [#allocation4], 4
      %s32 = int_to_ptr.vmem [resolvable:$true] %s31
      %37 = dma.hbm_to_vmem [thread:$0]  %s1, 256, %s32, [#allocation5], 64, 64, 4
    $region9: #{tpu_custom_call.1} parent=1 // pred_fallthru
      _
    // Predicated region
    $region10: #{tpu_custom_call.1} parent=1 // pred_check
      _
    $region11: #{tpu_custom_call.1} parent=1 // pred_check_branch
      %39 = sbr.rel (0) target = $region13
    $region12: #{tpu_custom_call.1} parent=1 // pred_region
      _
    $region13: #{tpu_custom_call.1} parent=1 // pred_fallthru
      _
    // Predicated region
    $region14: #{tpu_custom_call.1} parent=1 // pred_check
      _
    $region15: #{tpu_custom_call.1} parent=1 // pred_check_branch
      %41 = sbr.rel (0) target = $region17
    $region16: #{tpu_custom_call.1} parent=1 // pred_region
      _
    $region17: #{tpu_custom_call.1} parent=1 // pred_fallthru
      _
    // Predicated region
    $region18: #{tpu_custom_call.1} parent=1 // pred_check
      _
    $region19: #{tpu_custom_call.1} parent=1 // pred_check_branch
      %43 = sbr.rel (0) target = $region21
    $region20: #{tpu_custom_call.1} parent=1 // pred_region
      _
    $region21: #{tpu_custom_call.1} parent=1 // pred_fallthru
      _
    // Predicated region
    $region22: #{tpu_custom_call.1} parent=1 // pred_check
      _
    $region23: #{tpu_custom_call.1} parent=1 // pred_check_branch
      %45 = sbr.rel (0) target = $region25
    $region24: #{tpu_custom_call.1} parent=1 // pred_region
      _
    $region25: #{tpu_custom_call.1} parent=1 // pred_fallthru
      _
    // Predicated region
    $region26: #{tpu_custom_call.1} parent=1 // pred_check
      _
    $region27: #{tpu_custom_call.1} parent=1 // pred_check_branch
      %47 = sbr.rel (0) target = $region29
    $region28: #{tpu_custom_call.1} parent=1 // pred_region
      _
    $region29: #{tpu_custom_call.1} parent=1 // pred_fallthru
      _
    // Predicated region
    $region30: #{tpu_custom_call.1} parent=1 // pred_check
      _
    $region31: #{tpu_custom_call.1} parent=1 // pred_check_branch
      %49 = sbr.rel (0) target = $region33
    $region32: #{tpu_custom_call.1} parent=1 // pred_region
      %50 = dma.done [#allocation3], 128
    $region33: #{tpu_custom_call.1} parent=1 // pred_fallthru
      _
    // Predicated region
    $region34: #{tpu_custom_call.1} parent=1 // pred_check
      _
    $region35: #{tpu_custom_call.1} parent=1 // pred_check_branch
      %52 = sbr.rel (0) target = $region37
    $region36: #{tpu_custom_call.1} parent=1 // pred_region
      %53 = dma.done [#allocation5], 256
    $region37: #{tpu_custom_call.1} parent=1 // pred_fallthru
      _
    %v55 = vld [vmem:[#allocation2] sm:$0xf]
    %v56 = vld [vmem:[#allocation2 + $0x4] sm:$0xf]
    %v57 = vld [vmem:[#allocation4] sm:$0xf]
    %v58 = vld [vmem:[#allocation4 + $0x4] sm:$0xf]
    %v59 = vld [vmem:[#allocation4 + $0x8] sm:$0xf]
    %v60 = vld [vmem:[#allocation4 + $0xc] sm:$0xf]
    %v61 = vld [vmem:[%s2] sm:$0x1]
    %v62 = vunpack.c.l.bf16 %v61
    %v63 = vlaneseq
    %v64 = vshrl.u32 %v63, 7
    %v65 = vsub.s32 0, %v64
    %v66 = vrot.slane %v62, %v65
    %v69 = vunpack.c.l.b16 %v55
    %v70 = vunpack.c.l.b16 %v56
    %v71 = vpack.c.b16 %v70, %v69
    %v76 = vunpack.c.l.b16 %v57
    %v77 = vunpack.c.l.b16 %v58
    %v78 = vunpack.c.l.b16 %v59
    %v79 = vunpack.c.l.b16 %v60
    %v80 = vpack.c.b16 %v77, %v76
    %v81 = vpack.c.b16 %v79, %v78
    %vm84 = vcmask 261120
    %v86 = vsel %vm84, %v71, 0
    %88 = vmatprep.subr.bf16.mxu0 0
    %89 = vmatpush1.bf16.msra.mxu0 0
    %90 = vmatprep.subr.bf16.mxu0 0
    %91 = vmatpush1.bf16.msra.mxu0 0
    %92 = vmatprep.subr.bf16.mxu0 0
    %93 = vmatpush1.bf16.msra.mxu0 0
    %94 = vmatprep.subr.bf16.mxu0 0
    %95 = vmatpush1.bf16.msra.mxu0 0
    %96 = vmatprep.subr.bf16.mxu0 0
    %97 = vmatpush1.bf16.msra.mxu0 0
    %98 = vmatprep.subr.bf16.mxu0 0
    %99 = vmatpush1.bf16.msra.mxu0 0
    %100 = vmatprep.subr.bf16.mxu0 0
    %101 = vmatpush1.bf16.msra.mxu0 %v81
    %102 = vmatprep.subr.bf16.mxu0 0
    %103 = vmatpush1.bf16.msra.mxu0 %v80
    %104 = vmatprep.subr.bf16.mxu0 0
    %105 = vmatpush2.bf16.msra.mxu0 0
    %106 = vmatprep.subr.bf16.mxu0 0
    %107 = vmatpush2.bf16.msra.mxu0 0
    %108 = vmatprep.subr.bf16.mxu0 0
    %109 = vmatpush2.bf16.msra.mxu0 0
    %110 = vmatprep.subr.bf16.mxu0 0
    %111 = vmatpush2.bf16.msra.mxu0 0
    %112 = vmatprep.subr.bf16.mxu0 0
    %113 = vmatpush2.bf16.msra.mxu0 0
    %114 = vmatprep.subr.bf16.mxu0 0
    %115 = vmatpush2.bf16.msra.mxu0 0
    %116 = vmatprep.subr.bf16.mxu0 0
    %117 = vmatpush2.bf16.msra.mxu0 0
    %118 = vmatprep.subr.bf16.mxu0 0
    %119 = vmatpush2.bf16.msra.mxu0 0
    %120 = vmatprep.mubr.bf16.mxu0 0
    %121 = vmatmul.mubr.bf16.gmra.mxu0 %v86
    %v122 = vpop.f32.mrf.mxu0
    %v123 = vadd.f32 %v66, %v122
    %v124 = vpop.f32.mrf.mxu0
    %v125 = vpop.f32.mrf.mxu0
    %v126 = vadd.f32 %v66, %v125
    %v127 = vpop.f32.mrf.mxu0
    %128 = vdwg.mxu0
    %v129 = vmax.f32 %v123, 0.0
    %v130 = vmax.f32 %v126, 0.0
    %v131 = vpack.c.bf16 %v130, %v129
    %v132 = vld [vmem:[%s3] sm:$0xf]
    %v133 = vld [vmem:[%s3 + $0x4] sm:$0xf]
    %v134 = vld [vmem:[%s3 + $0x8] sm:$0xf]
    %v135 = vld [vmem:[%s3 + $0xc] sm:$0xf]
    %v136 = vld [vmem:[%s3 + $0x10] sm:$0xf]
    %v137 = vld [vmem:[%s3 + $0x14] sm:$0xf]
    %v138 = vld [vmem:[%s3 + $0x18] sm:$0xf]
    %v139 = vld [vmem:[%s3 + $0x1c] sm:$0xf]
    %v140 = vld [vmem:[%s3 + $0x20] sm:$0xf]
    %v141 = vld [vmem:[%s3 + $0x24] sm:$0xf]
    %v142 = vld [vmem:[%s3 + $0x28] sm:$0xf]
    %v143 = vld [vmem:[%s3 + $0x2c] sm:$0xf]
    %v144 = vld [vmem:[%s3 + $0x30] sm:$0xf]
    %v145 = vld [vmem:[%s3 + $0x34] sm:$0xf]
    %v146 = vld [vmem:[%s3 + $0x38] sm:$0xf]
    %v147 = vld [vmem:[%s3 + $0x3c] sm:$0xf]
    %v148 = vld [vmem:[%s4] sm:$0x1]
    %v149 = vunpack.c.l.bf16 %v148
    %v150 = vlaneseq
    %v151 = vshrl.u32 %v150, 7
    %v152 = vsub.s32 0, %v151
    %v153 = vrot.slane %v149, %v152
    %v170 = vunpack.c.l.b16 %v132
    %v171 = vunpack.c.l.b16 %v133
    %v172 = vunpack.c.l.b16 %v134
    %v173 = vunpack.c.l.b16 %v135
    %v174 = vunpack.c.l.b16 %v136
    %v175 = vunpack.c.l.b16 %v137
    %v176 = vunpack.c.l.b16 %v138
    %v177 = vunpack.c.l.b16 %v139
    %v178 = vunpack.c.l.b16 %v140
    %v179 = vunpack.c.l.b16 %v141
    %v180 = vunpack.c.l.b16 %v142
    %v181 = vunpack.c.l.b16 %v143
    %v182 = vunpack.c.l.b16 %v144
    %v183 = vunpack.c.l.b16 %v145
    %v184 = vunpack.c.l.b16 %v146
    %v185 = vunpack.c.l.b16 %v147
    %v186 = vpack.c.b16 %v171, %v170
    %v187 = vpack.c.b16 %v173, %v172
    %v188 = vpack.c.b16 %v175, %v174
    %v189 = vpack.c.b16 %v177, %v176
    %v190 = vpack.c.b16 %v179, %v178
    %v191 = vpack.c.b16 %v181, %v180
    %v192 = vpack.c.b16 %v183, %v182
    %v193 = vpack.c.b16 %v185, %v184
    %202 = vmatprep.subr.bf16.mxu0 0
    %203 = vmatpush1.bf16.msra.mxu0 %v193
    %204 = vmatprep.subr.bf16.mxu0 0
    %205 = vmatpush1.bf16.msra.mxu0 %v192
    %206 = vmatprep.subr.bf16.mxu0 0
    %207 = vmatpush1.bf16.msra.mxu0 %v191
    %208 = vmatprep.subr.bf16.mxu0 0
    %209 = vmatpush1.bf16.msra.mxu0 %v190
    %210 = vmatprep.subr.bf16.mxu0 0
    %211 = vmatpush1.bf16.msra.mxu0 %v189
    %212 = vmatprep.subr.bf16.mxu0 0
    %213 = vmatpush1.bf16.msra.mxu0 %v188
    %214 = vmatprep.subr.bf16.mxu0 0
    %215 = vmatpush1.bf16.msra.mxu0 %v187
    %216 = vmatprep.subr.bf16.mxu0 0
    %217 = vmatpush1.bf16.msra.mxu0 %v186
    %218 = vmatprep.subr.bf16.mxu0 0
    %219 = vmatpush2.bf16.msra.mxu0 0
    %220 = vmatprep.subr.bf16.mxu0 0
    %221 = vmatpush2.bf16.msra.mxu0 0
    %222 = vmatprep.subr.bf16.mxu0 0
    %223 = vmatpush2.bf16.msra.mxu0 0
    %224 = vmatprep.subr.bf16.mxu0 0
    %225 = vmatpush2.bf16.msra.mxu0 0
    %226 = vmatprep.subr.bf16.mxu0 0
    %227 = vmatpush2.bf16.msra.mxu0 0
    %228 = vmatprep.subr.bf16.mxu0 0
    %229 = vmatpush2.bf16.msra.mxu0 0
    %230 = vmatprep.subr.bf16.mxu0 0
    %231 = vmatpush2.bf16.msra.mxu0 0
    %232 = vmatprep.subr.bf16.mxu0 0
    %233 = vmatpush2.bf16.msra.mxu0 0
    %234 = vmatprep.mubr.bf16.mxu0 0
    %235 = vmatmul.mubr.bf16.gmra.mxu0 %v131
    %v236 = vpop.f32.mrf.mxu0
    %v237 = vadd.f32 %v153, %v236
    %v238 = vpop.f32.mrf.mxu0
    %v239 = vpop.f32.mrf.mxu0
    %v240 = vadd.f32 %v153, %v239
    %v241 = vpop.f32.mrf.mxu0
    %242 = vdwg.mxu0
    %v243 = vmax.f32 %v237, 0.0
    %v244 = vmax.f32 %v240, 0.0
    %v245 = vpack.c.bf16 %v244, %v243
    %v246 = vld [vmem:[%s5] sm:$0xf]
    %v247 = vld [vmem:[%s5 + $0x4] sm:$0xf]
    %v248 = vld [vmem:[%s5 + $0x8] sm:$0xf]
    %v249 = vld [vmem:[%s5 + $0xc] sm:$0xf]
    %v250 = vld [vmem:[%s5 + $0x10] sm:$0xf]
    %v251 = vld [vmem:[%s5 + $0x14] sm:$0xf]
    %v252 = vld [vmem:[%s5 + $0x18] sm:$0xf]
    %v253 = vld [vmem:[%s5 + $0x1c] sm:$0xf]
    %v254 = vld [vmem:[%s5 + $0x20] sm:$0xf]
    %v255 = vld [vmem:[%s5 + $0x24] sm:$0xf]
    %v256 = vld [vmem:[%s5 + $0x28] sm:$0xf]
    %v257 = vld [vmem:[%s5 + $0x2c] sm:$0xf]
    %v258 = vld [vmem:[%s5 + $0x30] sm:$0xf]
    %v259 = vld [vmem:[%s5 + $0x34] sm:$0xf]
    %v260 = vld [vmem:[%s5 + $0x38] sm:$0xf]
    %v261 = vld [vmem:[%s5 + $0x3c] sm:$0xf]
    %v262 = vld [vmem:[%s6] sm:$0x1]
    %v263 = vunpack.c.l.bf16 %v262
    %v264 = vlaneseq
    %v265 = vshrl.u32 %v264, 7
    %v266 = vsub.s32 0, %v265
    %v267 = vrot.slane %v263, %v266
    %v284 = vunpack.c.l.b16 %v246
    %v285 = vunpack.c.l.b16 %v247
    %v286 = vunpack.c.l.b16 %v248
    %v287 = vunpack.c.l.b16 %v249
    %v288 = vunpack.c.l.b16 %v250
    %v289 = vunpack.c.l.b16 %v251
    %v290 = vunpack.c.l.b16 %v252
    %v291 = vunpack.c.l.b16 %v253
    %v292 = vunpack.c.l.b16 %v254
    %v293 = vunpack.c.l.b16 %v255
    %v294 = vunpack.c.l.b16 %v256
    %v295 = vunpack.c.l.b16 %v257
    %v296 = vunpack.c.l.b16 %v258
    %v297 = vunpack.c.l.b16 %v259
    %v298 = vunpack.c.l.b16 %v260
    %v299 = vunpack.c.l.b16 %v261
    %v300 = vpack.c.b16 %v285, %v284
    %v301 = vpack.c.b16 %v287, %v286
    %v302 = vpack.c.b16 %v289, %v288
    %v303 = vpack.c.b16 %v291, %v290
    %v304 = vpack.c.b16 %v293, %v292
    %v305 = vpack.c.b16 %v295, %v294
    %v306 = vpack.c.b16 %v297, %v296
    %v307 = vpack.c.b16 %v299, %v298
    %316 = vmatprep.subr.bf16.mxu0 0
    %317 = vmatpush1.bf16.msra.mxu0 %v307
    %318 = vmatprep.subr.bf16.mxu0 0
    %319 = vmatpush1.bf16.msra.mxu0 %v306
    %320 = vmatprep.subr.bf16.mxu0 0
    %321 = vmatpush1.bf16.msra.mxu0 %v305
    %322 = vmatprep.subr.bf16.mxu0 0
    %323 = vmatpush1.bf16.msra.mxu0 %v304
    %324 = vmatprep.subr.bf16.mxu0 0
    %325 = vmatpush1.bf16.msra.mxu0 %v303
    %326 = vmatprep.subr.bf16.mxu0 0
    %327 = vmatpush1.bf16.msra.mxu0 %v302
    %328 = vmatprep.subr.bf16.mxu0 0
    %329 = vmatpush1.bf16.msra.mxu0 %v301
    %330 = vmatprep.subr.bf16.mxu0 0
    %331 = vmatpush1.bf16.msra.mxu0 %v300
    %332 = vmatprep.subr.bf16.mxu0 0
    %333 = vmatpush2.bf16.msra.mxu0 0
    %334 = vmatprep.subr.bf16.mxu0 0
    %335 = vmatpush2.bf16.msra.mxu0 0
    %336 = vmatprep.subr.bf16.mxu0 0
    %337 = vmatpush2.bf16.msra.mxu0 0
    %338 = vmatprep.subr.bf16.mxu0 0
    %339 = vmatpush2.bf16.msra.mxu0 0
    %340 = vmatprep.subr.bf16.mxu0 0
    %341 = vmatpush2.bf16.msra.mxu0 0
    %342 = vmatprep.subr.bf16.mxu0 0
    %343 = vmatpush2.bf16.msra.mxu0 0
    %344 = vmatprep.subr.bf16.mxu0 0
    %345 = vmatpush2.bf16.msra.mxu0 0
    %346 = vmatprep.subr.bf16.mxu0 0
    %347 = vmatpush2.bf16.msra.mxu0 0
    %348 = vmatprep.mubr.bf16.mxu0 0
    %349 = vmatmul.mubr.bf16.gmra.mxu0 %v245
    %v350 = vpop.f32.mrf.mxu0
    %v351 = vadd.f32 %v267, %v350
    %v352 = vpop.f32.mrf.mxu0
    %v353 = vpop.f32.mrf.mxu0
    %v354 = vadd.f32 %v267, %v353
    %v355 = vpop.f32.mrf.mxu0
    %356 = vdwg.mxu0
    %v357 = vmax.f32 %v351, 0.0
    %v358 = vmax.f32 %v354, 0.0
    %vm359 = vcmask 15360
    %360 = vst.msk [vmem:[%s7] sm:$0xff] %vm359, %v357
    %361 = vst.msk [vmem:[%s7 + $0x8] sm:$0xff] %vm359, %v358
    // Predicated region
    $region38: #{tpu_custom_call.1} parent=1 // pred_check
      _
    $region39: #{tpu_custom_call.1} parent=1 // pred_check_branch
      %363 = sbr.rel (0) target = $region41
    $region40: #{tpu_custom_call.1} parent=1 // pred_region
      _
    $region41: #{tpu_custom_call.1} parent=1 // pred_fallthru
      _
    // Predicated region
    $region42: #{tpu_custom_call.1} parent=1 // pred_check
      _
    $region43: #{tpu_custom_call.1} parent=1 // pred_check_branch
      %365 = sbr.rel (0) target = $region45
    $region44: #{tpu_custom_call.1} parent=1 // pred_region
      _
    $region45: #{tpu_custom_call.1} parent=1 // pred_fallthru
      _
    %366 = vsyncpa [#allocation3], 1
    %367 = vsyncpa [#allocation5], 1

</llo_original>
